<compile_context>
chip_gen: v6e
topology: v6e:2x2x1
jax: 0.10.0
libtpu: 0.0.40
codegen_flags: <defaults>
</compile_context>

<pallas_src>
import functools

import jax
import jax.numpy as jnp
from jax import lax
from jax.experimental import pallas as pl
from jax.experimental.pallas import tpu as pltpu

_EPS = 1e-12           # F.normalize default eps
_EPS2 = _EPS * _EPS    # rsqrt(max(sq, eps^2)) == 1 / max(sqrt(sq), eps)


def _norm_linear_kernel(x_ref, w_ref, invx_ref, invw_ref, o_ref, acc_ref, *,
                        mxu_dtype):
    """Grid = (batch tile i, out tile j, K tile k); k is the reduction axis."""
    k = pl.program_id(2)

    @pl.when(k == 0)
    def _init():
        acc_ref[...] = jnp.zeros_like(acc_ref)

    # Per-tile cast to the MXU dtype (no-op if the caller already stores the
    # operands in that dtype); f32 accumulation on the MXU.  The contraction
    # is over the LAST axis of BOTH operands, so W is used in its native
    # (out_features, in_features) layout with no in-kernel transpose.
    xt = x_ref[...].astype(mxu_dtype)                    # (tm, tk)
    wt = w_ref[...].astype(mxu_dtype)                    # (tn, tk)
    acc_ref[...] += lax.dot_general(
        xt, wt,
        dimension_numbers=(((1,), (1,)), ((), ())),
        preferred_element_type=jnp.float32)

    @pl.when(k == pl.num_programs(2) - 1)
    def _finalize():
        # Deferred normalization: one broadcast multiply of the output tile by
        # the precomputed inverse row norms (f32), then cast to out dtype.
        o_ref[...] = (acc_ref[...] * invx_ref[...] * invw_ref[...]).astype(o_ref.dtype)
    # TODO(synk): if the W-stream DMA is still exposed for small-B / huge-OUT
    # problems, add pipeline_mode=pl.Buffered(3) on the W BlockSpec.


def _round_up(x: int, m: int) -> int:
    return (x + m - 1) // m * m


def _vmem_capacity_bytes() -> int:
    """Per-core VMEM capacity; conservative (v7x) fallback if unqueryable."""
    try:
        return int(pltpu.get_tpu_info().vmem_capacity_bytes)
    except Exception:
        return 64 * 1024 * 1024


def norm_linear(x, weight, *, tm=None, tn=None, tk=None,
                mxu_dtype=jnp.bfloat16, out_dtype=None):
    """NormLinear forward: cosine(x rows, weight rows) -> (B, out_features).

    x:      (B, in_features)
    weight: (out_features, in_features)   (PyTorch Parameter layout)
    """
    B, IN = x.shape
    OUT, IN_w = weight.shape
    assert IN == IN_w, "in_features mismatch"
    out_dtype = x.dtype if out_dtype is None else out_dtype

    # Generation-aware default tiles: v5e/v6e (128 MiB VMEM) get ~1K x 2K
    # tiles to approach the v6e ridge point; v7x (64 MiB) gets 512 x 1024.
    vmem_cap = _vmem_capacity_bytes()
    big_vmem = vmem_cap >= 100 * 1024 * 1024
    if tm is None:
        tm = 1024 if big_vmem else 512
    if tn is None:
        tn = 2048 if big_vmem else 1024
    if tk is None:
        tk = 512

    # Shrink tiles for small problems while keeping (8, 128) alignment.
    tm = min(tm, _round_up(B, 8))
    tn = min(tn, _round_up(OUT, 128))
    tk = min(tk, _round_up(IN, 128))
    Bp, OUTp, INp = _round_up(B, tm), _round_up(OUT, tn), _round_up(IN, tk)

    # Per-row inverse L2 norms, computed once in f32 from the original tensors
    # (single fused read of each operand; exact squares; no per-grid-step or
    # cross-tile recomputation inside the kernel).
    xf = x.astype(jnp.float32)
    wf = weight.astype(jnp.float32)
    inv_x = lax.rsqrt(jnp.maximum(jnp.sum(xf * xf, axis=1, keepdims=True), _EPS2))       # (B, 1)
    inv_w = lax.rsqrt(jnp.maximum(jnp.sum(wf * wf, axis=1, keepdims=True).T, _EPS2))     # (1, OUT)

    # Zero-pad to tile multiples only when required (identity otherwise); the
    # operands keep their original dtype -- no full-size bf16 copy of W is
    # written to HBM, the kernel casts per tile instead.
    def _pad2(a, rows, cols):
        return a if (rows == 0 and cols == 0) else jnp.pad(a, ((0, rows), (0, cols)))

    xp = _pad2(x, Bp - B, INp - IN)
    wp = _pad2(weight, OUTp - OUT, INp - IN)
    invx_p = _pad2(inv_x, Bp - B, 0)
    invw_p = _pad2(inv_w, 0, OUTp - OUT)

    grid = (Bp // tm, OUTp // tn, INp // tk)

    # Scoped-VMEM budget from the actual tile footprint, with headroom, capped
    # below the physical per-core capacity (=> <= 56 MiB on v7x).
    xb = jnp.dtype(xp.dtype).itemsize
    wb = jnp.dtype(wp.dtype).itemsize
    ob = jnp.dtype(out_dtype).itemsize
    vmem_bytes = (2 * tm * tk * xb            # x double buffer
                  + 2 * tn * tk * wb          # W double buffer
                  + 2 * tm * tn * ob          # output double buffer
                  + tm * tn * 4               # f32 accumulator scratch
                  + 2 * (tm + 8) * 128 * 4    # lane-padded inv-norm blocks
                  + 2 * 8 * tn * 4)
    headroom = 8 * 1024 * 1024
    vmem_limit = int(min(max(vmem_bytes + headroom, 32 * 1024 * 1024),
                         vmem_cap - headroom))

    kernel = functools.partial(_norm_linear_kernel, mxu_dtype=mxu_dtype)

    out_padded = pl.pallas_call(
        kernel,
        out_shape=jax.ShapeDtypeStruct((Bp, OUTp), out_dtype),
        grid=grid,
        in_specs=[
            pl.BlockSpec((tm, tk), lambda i, j, k: (i, k)),   # x tile
            pl.BlockSpec((tn, tk), lambda i, j, k: (j, k)),   # W tile (native layout)
            pl.BlockSpec((tm, 1), lambda i, j, k: (i, 0)),    # 1/||x_row|| (k-invariant)
            pl.BlockSpec((1, tn), lambda i, j, k: (0, j)),    # 1/||w_row|| (k-invariant)
        ],
        out_specs=pl.BlockSpec((tm, tn), lambda i, j, k: (i, j)),
        scratch_shapes=[
            pltpu.VMEM((tm, tn), jnp.float32),   # f32 dot accumulator
        ],
        compiler_params=pltpu.CompilerParams(
            dimension_semantics=("parallel", "parallel", "arbitrary"),
            vmem_limit_bytes=vmem_limit,
        ),
    )(xp, wp, invx_p, invw_p)

    return out_padded[:B, :OUT]


def _reference(x, weight):
    xn = x / jnp.maximum(jnp.linalg.norm(x, axis=1, keepdims=True), _EPS)
    wn = weight / jnp.maximum(jnp.linalg.norm(weight, axis=1, keepdims=True), _EPS)
    return xn @ wn.T


if __name__ == "__main__":
    key = jax.random.PRNGKey(0)
    k_x, k_w, k_x2, k_w2 = jax.random.split(key, 4)

    # Small shapes matching the module's toy usage.
    batch, in_features, out_features = 8, 32, 16
    x = jax.random.normal(k_x, (batch, in_features), dtype=jnp.float32)
    # nn.init.normal_(weight, 0, 0.01) -- deterministic synthetic init
    weight = 0.01 * jax.random.normal(k_w, (out_features, in_features),
                                      dtype=jnp.float32)

    out = jax.block_until_ready(norm_linear(x, weight))
    ref = _reference(x, weight)
    assert out.shape == (batch, out_features)
    err = float(jnp.max(jnp.abs(out.astype(jnp.float32) - ref)))
    assert err < 2e-2, f"mismatch vs reference (max abs err {err})"   # bf16 MXU tolerance

    # Multi-tile / ragged-shape case exercising the K accumulator and padding
    # paths (grid = (2, 2, 3)) with explicitly small tiles.
    b2, in2, out2 = 64, 300, 200
    x2 = jax.random.normal(k_x2, (b2, in2), dtype=jnp.float32)
    w2 = 0.01 * jax.random.normal(k_w2, (out2, in2), dtype=jnp.float32)
    out_big = jax.block_until_ready(norm_linear(x2, w2, tm=32, tn=128, tk=128))
    ref_big = _reference(x2, w2)
    assert out_big.shape == (b2, out2)
    err2 = float(jnp.max(jnp.abs(out_big.astype(jnp.float32) - ref_big)))
    assert err2 < 2e-2, f"mismatch vs reference (max abs err {err2})"

    print("KERNEL_OK")
</pallas_src>

<mosaic_0001>
module attributes {stable_mosaic.version = 11 : i64} {
  func.func @_norm_linear_kernel(%arg0: i32, %arg1: i32, %arg2: i32, %arg3: memref<8x128xf32, #tpu.memory_space<vmem>>, %arg4: memref<128x128xf32, #tpu.memory_space<vmem>>, %arg5: memref<8x1xf32, #tpu.memory_space<vmem>>, %arg6: memref<1x128xf32, #tpu.memory_space<vmem>>, %arg7: memref<8x128xf32, #tpu.memory_space<vmem>>, %arg8: memref<8x128xf32, #tpu.memory_space<vmem>>) attributes {dimension_semantics = [#tpu.dimension_semantics<parallel>, #tpu.dimension_semantics<parallel>, #tpu.dimension_semantics<arbitrary>], iteration_bounds = array<i64: 1, 1, 1>, scalar_prefetch = 0 : i64, scratch_operands = 1 : i64, tpu.core_type = #tpu.core_type<tc>, window_params = [{transform_indices = @transform_0, window_bounds = array<i64: 8, 128>}, {transform_indices = @transform_1, window_bounds = array<i64: 128, 128>}, {transform_indices = @transform_2, window_bounds = array<i64: 8, 1>}, {transform_indices = @transform_3, window_bounds = array<i64: 1, 128>}, {transform_indices = @transform_4, window_bounds = array<i64: 8, 128>}]} {
    %c0_i32 = arith.constant 0 : i32
    %0 = arith.cmpi eq, %arg2, %c0_i32 : i32
    %1 = arith.extui %0 : i1 to i32
    %c0_i32_0 = arith.constant 0 : i32
    %2 = arith.cmpi ne, %1, %c0_i32_0 : i32
    scf.if %2 {
      %cst_10 = arith.constant 0.000000e+00 : f32
      %14 = vector.broadcast %cst_10 : f32 to vector<8x128xf32>
      %c0_11 = arith.constant 0 : index
      %c0_12 = arith.constant 0 : index
      %15 = vector.load %arg8[%c0_11, %c0_12] : memref<8x128xf32, #tpu.memory_space<vmem>>, vector<8x128xf32>
      tpu.vector_store %arg8[%c0_11, %c0_12], %14 {strides = array<i32>} : memref<8x128xf32, #tpu.memory_space<vmem>>, vector<8x128xf32>,
    } else {
    }
    %c0 = arith.constant 0 : index
    %c0_1 = arith.constant 0 : index
    %3 = vector.load %arg3[%c0, %c0_1] : memref<8x128xf32, #tpu.memory_space<vmem>>, vector<8x128xf32>
    %4 = arith.truncf %3 : vector<8x128xf32> to vector<8x128xbf16>
    %c0_2 = arith.constant 0 : index
    %c0_3 = arith.constant 0 : index
    %5 = vector.load %arg4[%c0_2, %c0_3] : memref<128x128xf32, #tpu.memory_space<vmem>>, vector<128x128xf32>
    %6 = arith.truncf %5 : vector<128x128xf32> to vector<128x128xbf16>
    %c0_4 = arith.constant 0 : index
    %c0_5 = arith.constant 0 : index
    %7 = vector.load %arg8[%c0_4, %c0_5] : memref<8x128xf32, #tpu.memory_space<vmem>>, vector<8x128xf32>
    %cst = arith.constant dense<0.000000e+00> : vector<8x128xf32>
    %8 = tpu.matmul %4, %6, %cst {dimension_numbers = #tpu.dot_dimension_numbers<[1], [1], [0], [0], [0, 0, 1, 0], [], []>} : vector<8x128xbf16>, vector<128x128xbf16>, vector<8x128xf32> -> vector<8x128xf32>
    %9 = arith.addf %7, %8 : vector<8x128xf32>
    %c0_6 = arith.constant 0 : index
    %c0_7 = arith.constant 0 : index
    %10 = vector.load %arg8[%c0_6, %c0_7] : memref<8x128xf32, #tpu.memory_space<vmem>>, vector<8x128xf32>
    tpu.vector_store %arg8[%c0_6, %c0_7], %9 {strides = array<i32>} : memref<8x128xf32, #tpu.memory_space<vmem>>, vector<8x128xf32>,
    %c0_i32_8 = arith.constant 0 : i32
    %11 = arith.cmpi eq, %arg2, %c0_i32_8 : i32
    %12 = arith.extui %11 : i1 to i32
    %c0_i32_9 = arith.constant 0 : i32
    %13 = arith.cmpi ne, %12, %c0_i32_9 : i32
    scf.if %13 {
      %c0_10 = arith.constant 0 : index
      %c0_11 = arith.constant 0 : index
      %14 = vector.load %arg8[%c0_10, %c0_11] : memref<8x128xf32, #tpu.memory_space<vmem>>, vector<8x128xf32>
      %c0_12 = arith.constant 0 : index
      %c0_13 = arith.constant 0 : index
      %15 = vector.load %arg5[%c0_12, %c0_13] : memref<8x1xf32, #tpu.memory_space<vmem>>, vector<8x1xf32>
      %16 = vector.broadcast %15 : vector<8x1xf32> to vector<8x128xf32>
      %17 = arith.mulf %14, %16 : vector<8x128xf32>
      %c0_14 = arith.constant 0 : index
      %c0_15 = arith.constant 0 : index
      %18 = vector.load %arg6[%c0_14, %c0_15] : memref<1x128xf32, #tpu.memory_space<vmem>>, vector<1x128xf32>
      %19 = vector.broadcast %18 : vector<1x128xf32> to vector<8x128xf32>
      %20 = arith.mulf %17, %19 : vector<8x128xf32>
      %c0_16 = arith.constant 0 : index
      %c0_17 = arith.constant 0 : index
      %21 = vector.load %arg7[%c0_16, %c0_17] : memref<8x128xf32, #tpu.memory_space<vmem>>, vector<8x128xf32>
      tpu.vector_store %arg7[%c0_16, %c0_17], %20 {strides = array<i32>} : memref<8x128xf32, #tpu.memory_space<vmem>>, vector<8x128xf32>,
    } else {
    }
    return
  }
  func.func @transform_0(%arg0: i32, %arg1: i32, %arg2: i32) -> (i32, i32) {
    %c0_i32 = arith.constant 0 : i32
    return %arg0, %arg2 : i32, i32
  }
  func.func @transform_1(%arg0: i32, %arg1: i32, %arg2: i32) -> (i32, i32) {
    %c0_i32 = arith.constant 0 : i32
    return %arg1, %arg2 : i32, i32
  }
  func.func @transform_2(%arg0: i32, %arg1: i32, %arg2: i32) -> (i32, i32) {
    %c0_i32 = arith.constant 0 : i32
    %c0_i32_0 = arith.constant 0 : i32
    return %arg0, %c0_i32 : i32, i32
  }
  func.func @transform_3(%arg0: i32, %arg1: i32, %arg2: i32) -> (i32, i32) {
    %c0_i32 = arith.constant 0 : i32
    %c0_i32_0 = arith.constant 0 : i32
    return %c0_i32, %arg1 : i32, i32
  }
  func.func @transform_4(%arg0: i32, %arg1: i32, %arg2: i32) -> (i32, i32) {
    %c0_i32 = arith.constant 0 : i32
    return %arg0, %arg1 : i32, i32
  }
}

</mosaic_0001>

<llo_original>
// kernel: tpu_custom_call.1
$region0: #{tpu_custom_call.1}
  #allocation0 [shape = 'u32[]', space=smem, size = 0x4, offset = 0x4, fixed_abs, tag = 'smem constant byte address 0x4 - core index']
  #allocation1 [shape = 'u32[144,128]{1,0:T(1,128)}', space=vmem, size = 0x12000, scoped, tag = 'internal scratch']
  #allocation2 [shape = 'f32[8,128]{1,0:T(8,128)}', space=vmem, size = 0x1000, scoped, tag = 'scratch operand']
  %s0 = inlined_call_operand.vmem [shape: f32[8,128], index: 0, kind: input, shape index: {}]
  %s1 = inlined_call_operand.hbm [shape: f32[128,128], index: 1, kind: input, shape index: {}]
  %s2 = inlined_call_operand.vmem [shape: f32[8,1], index: 2, kind: input, shape index: {}]
  %s3 = inlined_call_operand.vmem [shape: f32[1,128], index: 3, kind: input, shape index: {}]
  %s4 = inlined_call_operand.hbm [shape: f32[8,128], index: 4, kind: output, shape index: {}]
  %s5 = sld [smem:[#allocation0]]
  $region38: #{tpu_custom_call.1} parent=0
    _
  %s7 = ssub.s32 1, %s5
  %s8 = scalar_select 0, %s7, %s5
  $region1: #{tpu_custom_call.1} parent=0
    #allocation3 [shape = 'u8[65536]{0}', space=vmem, size = 0x10000, scoped, tag = 'input window, operand 1, single buffered']
    #allocation4 [shape = 's32[1]{0}', space=sflag, size = 0x4, scoped, tag = 'scoped memory for tpu_custom_call.1']
    #allocation5 [shape = 's32[1]{0}', space=sflag, size = 0x4, scoped, tag = 'scoped memory for tpu_custom_call.1']
    #allocation6 [shape = 'u8[4096]{0}', space=vmem, size = 0x1000, scoped, tag = 'output window, operand 0, single buffered']
    %9 = vsyncpa [#allocation4], 0
    %10 = vsyncpa [#allocation5], 0
    // Predicated region
    $region2: #{tpu_custom_call.1} parent=1 // pred_check
      _
    $region3: #{tpu_custom_call.1} parent=1 // pred_check_branch
      %12 = sbr.rel (0) target = $region5
    $region4: #{tpu_custom_call.1} parent=1 // pred_region
      _
    $region5: #{tpu_custom_call.1} parent=1 // pred_fallthru
      _
    // Predicated region
    $region6: #{tpu_custom_call.1} parent=1 // pred_check
      _
    $region7: #{tpu_custom_call.1} parent=1 // pred_check_branch
      %14 = sbr.rel (0) target = $region9
    $region8: #{tpu_custom_call.1} parent=1 // pred_region
      %s16 = ssub.s32 2048, 2048
      %17 = vsyncadd [#allocation4], %s16
      %s18 = sshll.u32 [#allocation3], 4
      %s19 = int_to_ptr.vmem [resolvable:$true] %s18
      %24 = dma.hbm_to_vmem [thread:$0]  %s1, 2048, %s19, [#allocation4], 128, 128, 8
    $region9: #{tpu_custom_call.1} parent=1 // pred_fallthru
      _
    // Predicated region
    $region10: #{tpu_custom_call.1} parent=1 // pred_check
      _
    $region11: #{tpu_custom_call.1} parent=1 // pred_check_branch
      %26 = sbr.rel (0) target = $region13
    $region12: #{tpu_custom_call.1} parent=1 // pred_region
      _
    $region13: #{tpu_custom_call.1} parent=1 // pred_fallthru
      _
    // Predicated region
    $region14: #{tpu_custom_call.1} parent=1 // pred_check
      _
    $region15: #{tpu_custom_call.1} parent=1 // pred_check_branch
      %28 = sbr.rel (0) target = $region17
    $region16: #{tpu_custom_call.1} parent=1 // pred_region
      _
    $region17: #{tpu_custom_call.1} parent=1 // pred_fallthru
      _
    // Predicated region
    $region18: #{tpu_custom_call.1} parent=1 // pred_check
      _
    $region19: #{tpu_custom_call.1} parent=1 // pred_check_branch
      %30 = sbr.rel (0) target = $region21
    $region20: #{tpu_custom_call.1} parent=1 // pred_region
      %31 = dma.done [#allocation4], 2048
    $region21: #{tpu_custom_call.1} parent=1 // pred_fallthru
      _
    %p33 = scmp.eq.s32.totalorder 0, 0
    // Predicated region
    $region22: #{tpu_custom_call.1} parent=1 // pred_check
      %p34 = pneg %p33
    $region23: #{tpu_custom_call.1} parent=1 // pred_check_branch
      %36 = sbr.rel (%p34) target = $region25
    $region24: #{tpu_custom_call.1} parent=1 // pred_region
      %37 = vst [vmem:[#allocation2] sm:$0xff] 0.0
    $region25: #{tpu_custom_call.1} parent=1 // pred_fallthru
      _
    %v38 = vld [vmem:[%s0] sm:$0xff]
    %v39 = vpack.c.bf16 %v38, %v38
    %v40 = vld [vmem:[#allocation3] sm:$0xff]
    %v41 = vld [vmem:[#allocation3 + $0x8] sm:$0xff]
    %v42 = vld [vmem:[#allocation3 + $0x10] sm:$0xff]
    %v43 = vld [vmem:[#allocation3 + $0x18] sm:$0xff]
    %v44 = vld [vmem:[#allocation3 + $0x20] sm:$0xff]
    %v45 = vld [vmem:[#allocation3 + $0x28] sm:$0xff]
    %v46 = vld [vmem:[#allocation3 + $0x30] sm:$0xff]
    %v47 = vld [vmem:[#allocation3 + $0x38] sm:$0xff]
    %v48 = vld [vmem:[#allocation3 + $0x40] sm:$0xff]
    %v49 = vld [vmem:[#allocation3 + $0x48] sm:$0xff]
    %v50 = vld [vmem:[#allocation3 + $0x50] sm:$0xff]
    %v51 = vld [vmem:[#allocation3 + $0x58] sm:$0xff]
    %v52 = vld [vmem:[#allocation3 + $0x60] sm:$0xff]
    %v53 = vld [vmem:[#allocation3 + $0x68] sm:$0xff]
    %v54 = vld [vmem:[#allocation3 + $0x70] sm:$0xff]
    %v55 = vld [vmem:[#allocation3 + $0x78] sm:$0xff]
    %v56 = vpack.c.bf16 %v41, %v40
    %v57 = vpack.c.bf16 %v43, %v42
    %v58 = vpack.c.bf16 %v45, %v44
    %v59 = vpack.c.bf16 %v47, %v46
    %v60 = vpack.c.bf16 %v49, %v48
    %v61 = vpack.c.bf16 %v51, %v50
    %v62 = vpack.c.bf16 %v53, %v52
    %v63 = vpack.c.bf16 %v55, %v54
    %v64 = vld [vmem:[#allocation2] sm:$0xff]
    %65 = vmatprep.subr.bf16.mxu0 0
    %66 = vmatpush1.bf16.xpose.msra.mxu0 %v63
    %67 = vmatprep.subr.bf16.mxu0 0
    %68 = vmatpush1.bf16.xpose.msra.mxu0 %v62
    %69 = vmatprep.subr.bf16.mxu0 0
    %70 = vmatpush1.bf16.xpose.msra.mxu0 %v61
    %71 = vmatprep.subr.bf16.mxu0 0
    %72 = vmatpush1.bf16.xpose.msra.mxu0 %v60
    %73 = vmatprep.subr.bf16.mxu0 0
    %74 = vmatpush1.bf16.xpose.msra.mxu0 %v59
    %75 = vmatprep.subr.bf16.mxu0 0
    %76 = vmatpush1.bf16.xpose.msra.mxu0 %v58
    %77 = vmatprep.subr.bf16.mxu0 0
    %78 = vmatpush1.bf16.xpose.msra.mxu0 %v57
    %79 = vmatprep.subr.bf16.mxu0 0
    %80 = vmatpush1.bf16.xpose.msra.mxu0 %v56
    %81 = vmatprep.subr.bf16.mxu0 0
    %82 = vmatpush2.bf16.xpose.msra.mxu0 0
    %83 = vmatprep.subr.bf16.mxu0 0
    %84 = vmatpush2.bf16.xpose.msra.mxu0 0
    %85 = vmatprep.subr.bf16.mxu0 0
    %86 = vmatpush2.bf16.xpose.msra.mxu0 0
    %87 = vmatprep.subr.bf16.mxu0 0
    %88 = vmatpush2.bf16.xpose.msra.mxu0 0
    %89 = vmatprep.subr.bf16.mxu0 0
    %90 = vmatpush2.bf16.xpose.msra.mxu0 0
    %91 = vmatprep.subr.bf16.mxu0 0
    %92 = vmatpush2.bf16.xpose.msra.mxu0 0
    %93 = vmatprep.subr.bf16.mxu0 0
    %94 = vmatpush2.bf16.xpose.msra.mxu0 0
    %95 = vmatprep.subr.bf16.mxu0 0
    %96 = vmatpush2.bf16.xpose.msra.mxu0 0
    %97 = vmatprep.mubr.bf16.mxu0 0
    %98 = vmatmul.mubr.bf16.gmra.mxu0 %v39
    %v99 = vpop.f32.mrf.mxu0
    %v100 = vadd.f32 0.0, %v99
    %v101 = vpop.f32.mrf.mxu0
    %v102 = vpop.f32.mrf.mxu0
    %v103 = vpop.f32.mrf.mxu0
    %104 = vdwg.mxu0
    %v105 = vadd.f32 %v64, %v100
    %106 = vst [vmem:[#allocation2] sm:$0xff] %v105
    // Predicated region
    $region26: #{tpu_custom_call.1} parent=1 // pred_check
      %p107 = pneg %p33
    $region27: #{tpu_custom_call.1} parent=1 // pred_check_branch
      %109 = sbr.rel (%p107) target = $region29
    $region28: #{tpu_custom_call.1} parent=1 // pred_region
      %v110 = vld [vmem:[#allocation2] sm:$0xff]
      %v111 = vld [vmem:[%s2] sm:$0xff]
      %113 = vset.pattern.permute.xlu0 0
      %114 = vperm.xlu0 %113, %v111
      %v115 = vpop.permute.xlu0 %114
      %v117 = vmul.f32 %v110, %v115
      %v118 = vld [vmem:[%s3] sm:$0x1]
      %v120 = vlaneseq
      %v121 = vshrl.u32 %v120, 7
      %v122 = vsub.s32 0, %v121
      %v123 = vrot.slane %v118, %v122
      %v125 = vmul.f32 %v117, %v123
      %126 = vst [vmem:[#allocation6] sm:$0xff] %v125
    $region29: #{tpu_custom_call.1} parent=1 // pred_fallthru
      _
    // Predicated region
    $region30: #{tpu_custom_call.1} parent=1 // pred_check
      _
    $region31: #{tpu_custom_call.1} parent=1 // pred_check_branch
      %128 = sbr.rel (0) target = $region33
    $region32: #{tpu_custom_call.1} parent=1 // pred_region
      %s130 = ssub.s32 128, 128
      %131 = vsyncadd [#allocation5], %s130
      %s133 = sshll.u32 [#allocation6], 4
      %s134 = int_to_ptr.vmem [resolvable:$true] %s133
      %136 = dma.vmem_to_hbm [thread:$0]  %s134, 128, %s4, [#allocation5]
    $region33: #{tpu_custom_call.1} parent=1 // pred_fallthru
      _
    // Predicated region
    $region34: #{tpu_custom_call.1} parent=1 // pred_check
      _
    $region35: #{tpu_custom_call.1} parent=1 // pred_check_branch
      %138 = sbr.rel (0) target = $region37
    $region36: #{tpu_custom_call.1} parent=1 // pred_region
      %139 = dma.done [#allocation5], 128
    $region37: #{tpu_custom_call.1} parent=1 // pred_fallthru
      _
    %140 = vsyncpa [#allocation4], 1
    %141 = vsyncpa [#allocation5], 1

</llo_original>
